<compile_context>
chip_gen: v6e
topology: v6e:2x2x1
jax: 0.10.0
libtpu: 0.0.40
codegen_flags: <defaults>
</compile_context>

<pallas_src>
import jax
import jax.numpy as jnp
from jax import lax
from jax.experimental import pallas as pl
from jax.experimental.pallas import tpu as pltpu

# Above the 16/32 MiB scoped defaults on v5e/v6e, below v7x's 64 MiB physical VMEM.
_VMEM_LIMIT = 48 * 1024 * 1024


# ----------------------------------------------------------------------------
# Pallas kernels
# ----------------------------------------------------------------------------
def _stem_layer1_kernel(x_ref, w0_ref, s0_ref, b0_ref, w1_ref, s1_ref, b1_ref, o_ref):
    """Fused (patches @ W_stem) -> BN -> ReLU -> (@ W_layer1) -> BN -> ReLU.

    x_ref: (TM, 128) bf16 space-to-depth image patches; weights bf16; epilogue f32.
    The second matmul runs on the VMEM-resident output of the first, so the /4
    feature map never round-trips HBM.
    """
    h = jnp.dot(x_ref[...], w0_ref[...], preferred_element_type=jnp.float32)
    h = jnp.maximum(h * s0_ref[...] + b0_ref[...], 0.0)
    h = jnp.dot(h.astype(w1_ref.dtype), w1_ref[...], preferred_element_type=jnp.float32)
    h = jnp.maximum(h * s1_ref[...] + b1_ref[...], 0.0)
    o_ref[...] = h.astype(o_ref.dtype)


def _conv2x2_block_kernel(z_ref, znext_ref, w_ref, s_ref, b_ref, o_ref, acc_ref):
    """2x2/stride-1 conv (space-to-depth form of 3x3/stride-2/pad-1) + BN + ReLU.

    z_ref:     (1, R, Wp, C4)   R s2d rows (Wp = Wo_p + 1, Wo_p % 16 == 0)
    znext_ref: (1, 1, Wp, C4)   the single halo row the dp=1 taps of row R-1 need
    w_ref:     (4, C4, TN)      tap-major assembled weights (tap = 2*dp + dq)
    s_ref/b_ref: (1, TN)        folded BatchNorm scale / shift (f32)
    o_ref:     (1, R, Wo_p, TN) bf16 activations
    acc_ref:   (R*Wo_p, TN)     f32 accumulator scratch

    Every tap is ONE large-M matmul (M = R*Wo_p or (R-1)*Wo_p) over a contiguous,
    layout-preserving flatten of a static VMEM slice, accumulated in place; one
    f32 epilogue and one lane-dense block store per grid step.
    """
    R = o_ref.shape[1]
    Wo = o_ref.shape[2]                 # multiple of 16 -> aligned flattens
    TN = o_ref.shape[3]
    C4 = z_ref.shape[3]
    M = R * Wo
    Mm = (R - 1) * Wo
    f32 = jnp.float32

    # dp = 0 taps: output rows 0..R-1 read main-block s2d rows 0..R-1.
    z00 = z_ref[0, :, 0:Wo, :].reshape(M, C4)
    z01 = z_ref[0, :, 1:Wo + 1, :].reshape(M, C4)
    acc_ref[...] = (jnp.dot(z00, w_ref[0], preferred_element_type=f32)
                    + jnp.dot(z01, w_ref[1], preferred_element_type=f32))

    # dp = 1 taps for output rows 0..R-2: s2d rows 1..R-1, still in the main block.
    if R > 1:
        z10 = z_ref[0, 1:R, 0:Wo, :].reshape(Mm, C4)
        z11 = z_ref[0, 1:R, 1:Wo + 1, :].reshape(Mm, C4)
        acc_ref[0:Mm, :] += (jnp.dot(z10, w_ref[2], preferred_element_type=f32)
                             + jnp.dot(z11, w_ref[3], preferred_element_type=f32))

    # dp = 1 taps for output row R-1: the halo s2d row streamed as znext.
    n0 = znext_ref[0, 0, 0:Wo, :]
    n1 = znext_ref[0, 0, 1:Wo + 1, :]
    acc_ref[Mm:M, :] += (jnp.dot(n0, w_ref[2], preferred_element_type=f32)
                         + jnp.dot(n1, w_ref[3], preferred_element_type=f32))

    y = jnp.maximum(acc_ref[...] * s_ref[...] + b_ref[...], 0.0)   # f32 epilogue
    o_ref[...] = y.reshape(1, R, Wo, TN).astype(o_ref.dtype)


# ----------------------------------------------------------------------------
# Tiling helpers
# ----------------------------------------------------------------------------
def _pick_block_m(m, target, min_steps=4):
    """Largest multiple-of-8 tile <= target that keeps >= min_steps grid steps
    (keeps both v7x TensorCores busy); tiny m falls back to a single tile."""
    if m <= 8:
        return max(1, m)
    cap = ((-(-m // min_steps)) + 7) // 8 * 8
    return max(8, min(target, cap))


def _pick_rows(ho, wo_p, c4, b, nj):
    """Row tile so M = R*Wo_p ~ 2048 output pixels per step (amortizes the
    ~0.35us per-step overhead), capped so the bf16 input block stays <= ~4 MiB."""
    target_m = max(256, min(2048, (4 * 1024 * 1024) // (2 * c4)))
    r = max(1, min(ho, target_m // wo_p))
    # keep at least 2 parallel grid steps so both v7x TensorCores get work
    if b * nj * pl.cdiv(ho, r) < 2 and ho >= 2:
        r = pl.cdiv(ho, 2)
    return r


# ----------------------------------------------------------------------------
# Wrappers (glue is pure layout; all FLOPs run inside the kernels above)
# ----------------------------------------------------------------------------
def _stem_layer1(x_nhwc, p_stem, p_l1, *, tm_target=2048):
    """Fused 4x4/s4 patchify conv + 1x1 conv, both with folded BN + ReLU."""
    w0, s0, b0 = p_stem            # w0: (128, C0) bf16
    w1, s1, b1 = p_l1              # w1: (C0, C1) bf16
    B, H, W, C = x_nhwc.shape
    H4, W4 = H // 4, W // 4
    # bf16 BEFORE the patchify layout copy (halves its HBM traffic)
    x = x_nhwc[:, :H4 * 4, :W4 * 4, :].astype(jnp.bfloat16)
    x = jnp.pad(x, ((0, 0), (0, 0), (0, 0), (0, 8 - C)))   # channels 3 -> 8, K = 128
    # stride-4 patches do not overlap -> a single reshape/transpose, no duplication
    x = x.reshape(B, H4, 4, W4, 4, 8).transpose(0, 1, 3, 2, 4, 5).reshape(-1, 128)
    M = B * H4 * W4

    C0, C1 = w0.shape[1], w1.shape[1]
    tm = _pick_block_m(M, tm_target)
    nM = pl.cdiv(M, tm)
    Mp = nM * tm
    if Mp != M:                       # pad so every block divides exactly (no ragged IO)
        x = jnp.pad(x, ((0, Mp - M), (0, 0)))

    flops = 2 * Mp * (128 * C0 + C0 * C1)
    bytes_accessed = 2 * (Mp * 128 + 128 * C0 + C0 * C1 + Mp * C1) + 8 * (C0 + C1)

    out = pl.pallas_call(
        _stem_layer1_kernel,
        out_shape=jax.ShapeDtypeStruct((Mp, C1), jnp.bfloat16),
        grid_spec=pltpu.PrefetchScalarGridSpec(
            num_scalar_prefetch=0,
            grid=(nM,),
            in_specs=[
                pl.BlockSpec((tm, 128), lambda i: (i, 0)),
                pl.BlockSpec((128, C0), lambda i: (0, 0)),
                pl.BlockSpec((1, C0), lambda i: (0, 0)),
                pl.BlockSpec((1, C0), lambda i: (0, 0)),
                pl.BlockSpec((C0, C1), lambda i: (0, 0)),
                pl.BlockSpec((1, C1), lambda i: (0, 0)),
                pl.BlockSpec((1, C1), lambda i: (0, 0)),
            ],
            out_specs=pl.BlockSpec((tm, C1), lambda i: (i, 0)),
        ),
        compiler_params=pltpu.CompilerParams(
            dimension_semantics=("parallel",),
            vmem_limit_bytes=_VMEM_LIMIT,
        ),
        cost_estimate=pl.CostEstimate(
            flops=flops, transcendentals=0, bytes_accessed=bytes_accessed),
    )(x, w0, s0.reshape(1, C0), b0.reshape(1, C0),
      w1, s1.reshape(1, C1), b1.reshape(1, C1))
    return out[:M].reshape(B, H4, W4, C1)


def _conv3x3s2_bn_relu(x_nhwc, p):
    """3x3 / stride-2 / pad-1 conv + folded BN + ReLU (NHWC bf16 in/out)."""
    w4, scale, shift = p                     # w4: (4, 4*Cin, Cout) bf16
    B, H, W, C = x_nhwc.shape
    Ho, Wo = (H + 1) // 2, (W + 1) // 2
    C4 = 4 * C
    Cout = w4.shape[-1]

    # Pad the output width to a multiple of 16 (bf16 sublane packing) so the
    # in-kernel (R, Wo_p) -> (R*Wo_p) flattens are layout-preserving and stores
    # are large unmasked lane-dense vsts.  Junk columns come from zero padding.
    Wo_p = pl.cdiv(Wo, 16) * 16
    Wp = Wo_p + 1

    # Output-channel (N) tiling keeps weight blocks VMEM-resident even for real
    # ResNet-50 widths (layer4 Cout=2048) on v7x's 64 MiB VMEM.
    TN = Cout if Cout <= 512 else 512
    nJ = pl.cdiv(Cout, TN)

    R = _pick_rows(Ho, Wo_p, C4, B, nJ)
    nT = pl.cdiv(Ho, R)
    Ho_p = nT * R                 # padded output rows; junk rows sliced off below
    Hz = Ho_p + 1                 # s2d rows incl. the bottom halo -> every block
                                  # read is in-bounds by construction

    # conv pad (1 top/left) + zero pad up to the s2d extent; one fused layout copy.
    Hpad, Wpad = 2 * Hz, 2 * Wp
    z = jnp.pad(x_nhwc, ((0, 0), (1, Hpad - 1 - H), (1, Wpad - 1 - W), (0, 0)))
    z = z.reshape(B, Hz, 2, Wp, 2, C).transpose(0, 1, 3, 2, 4, 5).reshape(B, Hz, Wp, C4)
    # TODO(synk): fuse this s2d copy into the producing kernel's output layout to
    # remove one HBM round-trip per layer (biggest remaining win on v5e).

    grid = (B, nT, nJ)
    flops = 2 * B * Ho_p * Wo_p * (4 * C4) * Cout
    bytes_accessed = (2 * (B * Hz * Wp * C4 + 4 * C4 * Cout + B * Ho_p * Wo_p * Cout)
                      + 8 * Cout)

    out = pl.pallas_call(
        _conv2x2_block_kernel,
        out_shape=jax.ShapeDtypeStruct((B, Ho_p, Wo_p, Cout), jnp.bfloat16),
        grid_spec=pltpu.PrefetchScalarGridSpec(
            num_scalar_prefetch=0,
            grid=grid,
            in_specs=[
                # main block: R s2d rows
                pl.BlockSpec((1, R, Wp, C4), lambda b, t, j: (b, t, 0, 0)),
                # the single halo row (block size 1 => element index), always valid
                pl.BlockSpec((1, 1, Wp, C4), lambda b, t, j: (b, t * R + R, 0, 0)),
                pl.BlockSpec((4, C4, TN), lambda b, t, j: (0, 0, j)),
                pl.BlockSpec((1, TN), lambda b, t, j: (0, j)),
                pl.BlockSpec((1, TN), lambda b, t, j: (0, j)),
            ],
            out_specs=pl.BlockSpec((1, R, Wo_p, TN), lambda b, t, j: (b, t, 0, j)),
            scratch_shapes=[pltpu.VMEM((R * Wo_p, TN), jnp.float32)],
        ),
        compiler_params=pltpu.CompilerParams(
            dimension_semantics=("parallel", "parallel", "parallel"),
            vmem_limit_bytes=_VMEM_LIMIT,
        ),
        cost_estimate=pl.CostEstimate(
            flops=flops, transcendentals=0, bytes_accessed=bytes_accessed),
    )(z, z, w4, scale.reshape(1, Cout), shift.reshape(1, Cout))
    return out[:, :Ho, :Wo, :]


def _mask_nearest(mask, ho, wo):
    """F.interpolate(mode='nearest') + .to(bool): floor-index gather (pure data
    movement, kept in the wrapper)."""
    B, H, W = mask.shape
    ih = (jnp.arange(ho) * H) // ho
    iw = (jnp.arange(wo) * W) // wo
    return mask[:, ih][:, :, iw]


# ----------------------------------------------------------------------------
# Synthetic backbone parameters (deterministic, no checkpoint)
# ----------------------------------------------------------------------------
def _fold_conv3x3_weight(w):
    """(3,3,Cin,Cout) -> (4, 4*Cin, Cout): the 2x2/stride-1 taps of the conv over
    the space-to-depth input.  Tap index = dp*2+dq, channel index = (a*2+b)*Cin+c,
    with zeros where the original 3x3 tap index 2*dp+a (or 2*dq+b) would be 3."""
    kh, kw, cin, cout = w.shape
    assert kh == 3 and kw == 3
    w6 = jnp.zeros((2, 2, 2, 2, cin, cout), w.dtype)
    for dp in range(2):
        for dq in range(2):
            for a in range(2):
                for b in range(2):
                    i, j = 2 * dp + a, 2 * dq + b
                    if i < 3 and j < 3:
                        w6 = w6.at[dp, dq, a, b].set(w[i, j])
    return w6.reshape(4, 4 * cin, cout)


def init_backbone_params(key, widths=(128, 128, 256, 256, 256)):
    """Channel widths are multiples of 128 (conv outputs of 256 to fill the
    256-wide v6e/v7x MXU) so every kernel store is lane-dense.
    Returns (raw_params for the pure-JAX reference, fused_params for the kernels)."""
    c0, c1, c2, c3, c4 = widths
    defs = [
        ("stem",   4, 3,  c0),   # 4x4 / stride 4 / pad 0  -> /4
        ("layer1", 1, c0, c1),   # 1x1                      -> /4
        ("layer2", 3, c1, c2),   # 3x3 / stride 2 / pad 1   -> /8
        ("layer3", 3, c2, c3),   #                          -> /16
        ("layer4", 3, c3, c4),   #                          -> /32
    ]
    raw, fused = {}, {}
    for idx, (name, k, cin, cout) in enumerate(defs):
        kw_, ks_, kb_ = jax.random.split(jax.random.fold_in(key, idx), 3)
        fan_in = k * k * cin
        w = jax.random.normal(kw_, (k, k, cin, cout), jnp.float32) / jnp.sqrt(fan_in)
        scale = 1.0 + 0.1 * jax.random.normal(ks_, (cout,), jnp.float32)
        shift = 0.1 * jax.random.normal(kb_, (cout,), jnp.float32)
        raw[name] = (w, scale, shift)
        if k == 4:   # stem: pad image channels 3 -> 8, flatten to (4*4*8, C0) = (128, C0)
            wm = jnp.pad(w, ((0, 0), (0, 0), (0, 8 - cin), (0, 0))).reshape(128, cout)
        elif k == 1:
            wm = w.reshape(cin, cout)
        else:        # 3x3/s2 -> 2x2/s1 taps over the space-to-depth input
            wm = _fold_conv3x3_weight(w)
        fused[name] = (wm.astype(jnp.bfloat16), scale, shift)
    return raw, fused


# ----------------------------------------------------------------------------
# BackboneBase.forward
# ----------------------------------------------------------------------------
def backbone_base_forward(fused_params, tensors_nchw, mask, return_interm_layers=True):
    """tensors_nchw: (B, 3, H, W) f32, mask: (B, H, W) bool.
    Returns dict name -> (feature NCHW f32, mask (B, h, w) bool), mirroring
    {name: NestedTensor(tensor, mask)}."""
    x = jnp.transpose(tensors_nchw, (0, 2, 3, 1)).astype(jnp.float32)   # NCHW -> NHWC
    x = _stem_layer1(x, fused_params["stem"], fused_params["layer1"])   # /4  (fused)
    l2 = _conv3x3s2_bn_relu(x, fused_params["layer2"])                  # /8  (strides[0])
    l3 = _conv3x3s2_bn_relu(l2, fused_params["layer3"])                 # /16 (strides[1])
    l4 = _conv3x3s2_bn_relu(l3, fused_params["layer4"])                 # /32 (strides[2])

    xs = {"0": l2, "1": l3, "2": l4} if return_interm_layers else {"0": l4}

    out = {}
    for name, feat in xs.items():
        _, ho, wo, _ = feat.shape
        m = _mask_nearest(mask, ho, wo)                                 # nearest + to(bool)
        out[name] = (jnp.transpose(feat.astype(jnp.float32), (0, 3, 1, 2)), m)
    return out


# ----------------------------------------------------------------------------
# Pure-JAX reference (same bf16 operand quantization, f32 accumulation)
# ----------------------------------------------------------------------------
def _reference_forward(raw_params, tensors_nchw, return_interm_layers=True):
    def conv_bn_relu(x, p, stride, pad):
        w, scale, shift = p
        y = lax.conv_general_dilated(
            x.astype(jnp.bfloat16), w.astype(jnp.bfloat16),
            window_strides=(stride, stride),
            padding=((pad, pad), (pad, pad)),
            dimension_numbers=("NHWC", "HWIO", "NHWC"),
            preferred_element_type=jnp.float32)
        y = jnp.maximum(y * scale.reshape(1, 1, 1, -1) + shift.reshape(1, 1, 1, -1), 0.0)
        return y.astype(jnp.bfloat16)

    x = jnp.transpose(tensors_nchw, (0, 2, 3, 1)).astype(jnp.float32)
    x = conv_bn_relu(x, raw_params["stem"], 4, 0)
    x = conv_bn_relu(x, raw_params["layer1"], 1, 0)
    l2 = conv_bn_relu(x, raw_params["layer2"], 2, 1)
    l3 = conv_bn_relu(l2, raw_params["layer3"], 2, 1)
    l4 = conv_bn_relu(l3, raw_params["layer4"], 2, 1)
    feats = {"0": l2, "1": l3, "2": l4} if return_interm_layers else {"0": l4}
    return {k: jnp.transpose(v.astype(jnp.float32), (0, 3, 1, 2)) for k, v in feats.items()}


# ----------------------------------------------------------------------------
if __name__ == "__main__":
    key = jax.random.PRNGKey(0)
    k_img, k_mask, k_params = jax.random.split(key, 3)

    B, C, H, W = 2, 3, 64, 64
    img = jax.random.normal(k_img, (B, C, H, W), jnp.float32)
    mask = jax.random.bernoulli(k_mask, 0.3, (B, H, W))

    raw_params, fused_params = init_backbone_params(k_params)
    out = backbone_base_forward(fused_params, img, mask, return_interm_layers=True)
    out = jax.block_until_ready(out)

    ref = _reference_forward(raw_params, img, return_interm_layers=True)

    expected = {"0": (256, 8), "1": (256, 4), "2": (256, 2)}  # (channels, spatial)
    for name, (ch, sp) in expected.items():
        feat, m = out[name]
        assert feat.shape == (B, ch, sp, sp), (name, feat.shape)
        assert feat.dtype == jnp.float32
        assert m.shape == (B, sp, sp), (name, m.shape)
        assert m.dtype == jnp.bool_
        assert bool(jnp.all(jnp.isfinite(feat)))
        r = ref[name]
        err = float(jnp.max(jnp.abs(feat - r)))
        tol = 0.05 * (1.0 + float(jnp.max(jnp.abs(r))))  # bf16-relaxed tolerance
        assert err <= tol, (name, err, tol)

    print("KERNEL_OK")
</pallas_src>

<mosaic_0001>
module attributes {stable_mosaic.version = 11 : i64} {
  func.func @_stem_layer1_kernel(%arg0: i32, %arg1: memref<128x128xbf16, #tpu.memory_space<vmem>>, %arg2: memref<128x128xbf16, #tpu.memory_space<vmem>>, %arg3: memref<1x128xf32, #tpu.memory_space<vmem>>, %arg4: memref<1x128xf32, #tpu.memory_space<vmem>>, %arg5: memref<128x128xbf16, #tpu.memory_space<vmem>>, %arg6: memref<1x128xf32, #tpu.memory_space<vmem>>, %arg7: memref<1x128xf32, #tpu.memory_space<vmem>>, %arg8: memref<128x128xbf16, #tpu.memory_space<vmem>>) attributes {dimension_semantics = [#tpu.dimension_semantics<parallel>], iteration_bounds = array<i64: 4>, scalar_prefetch = 0 : i64, scratch_operands = 0 : i64, tpu.core_type = #tpu.core_type<tc>, window_params = [{transform_indices = @transform_0, window_bounds = array<i64: 128, 128>}, {pipeline_mode = #tpu.pipeline_mode<synchronous>, transform_indices = @transform_1, window_bounds = array<i64: 128, 128>}, {pipeline_mode = #tpu.pipeline_mode<synchronous>, transform_indices = @transform_2, window_bounds = array<i64: 1, 128>}, {pipeline_mode = #tpu.pipeline_mode<synchronous>, transform_indices = @transform_3, window_bounds = array<i64: 1, 128>}, {pipeline_mode = #tpu.pipeline_mode<synchronous>, transform_indices = @transform_4, window_bounds = array<i64: 128, 128>}, {pipeline_mode = #tpu.pipeline_mode<synchronous>, transform_indices = @transform_5, window_bounds = array<i64: 1, 128>}, {pipeline_mode = #tpu.pipeline_mode<synchronous>, transform_indices = @transform_6, window_bounds = array<i64: 1, 128>}, {transform_indices = @transform_7, window_bounds = array<i64: 128, 128>}]} {
    %c0 = arith.constant 0 : index
    %c0_0 = arith.constant 0 : index
    %0 = vector.load %arg1[%c0, %c0_0] : memref<128x128xbf16, #tpu.memory_space<vmem>>, vector<128x128xbf16>
    %c0_1 = arith.constant 0 : index
    %c0_2 = arith.constant 0 : index
    %1 = vector.load %arg2[%c0_1, %c0_2] : memref<128x128xbf16, #tpu.memory_space<vmem>>, vector<128x128xbf16>
    %cst = arith.constant dense<0.000000e+00> : vector<128x128xf32>
    %2 = tpu.matmul %0, %1, %cst {dimension_numbers = #tpu.dot_dimension_numbers<[1], [0], [0], [1], [0, 0, 1, 1], [], []>} : vector<128x128xbf16>, vector<128x128xbf16>, vector<128x128xf32> -> vector<128x128xf32>
    %c0_3 = arith.constant 0 : index
    %c0_4 = arith.constant 0 : index
    %3 = vector.load %arg3[%c0_3, %c0_4] : memref<1x128xf32, #tpu.memory_space<vmem>>, vector<1x128xf32>
    %4 = vector.broadcast %3 : vector<1x128xf32> to vector<128x128xf32>
    %5 = arith.mulf %2, %4 : vector<128x128xf32>
    %c0_5 = arith.constant 0 : index
    %c0_6 = arith.constant 0 : index
    %6 = vector.load %arg4[%c0_5, %c0_6] : memref<1x128xf32, #tpu.memory_space<vmem>>, vector<1x128xf32>
    %7 = vector.broadcast %6 : vector<1x128xf32> to vector<128x128xf32>
    %8 = arith.addf %5, %7 : vector<128x128xf32>
    %cst_7 = arith.constant 0.000000e+00 : f32
    %9 = vector.broadcast %cst_7 : f32 to vector<128x128xf32>
    %10 = arith.maximumf %8, %9 : vector<128x128xf32>
    %11 = arith.truncf %10 : vector<128x128xf32> to vector<128x128xbf16>
    %c0_8 = arith.constant 0 : index
    %c0_9 = arith.constant 0 : index
    %12 = vector.load %arg5[%c0_8, %c0_9] : memref<128x128xbf16, #tpu.memory_space<vmem>>, vector<128x128xbf16>
    %cst_10 = arith.constant dense<0.000000e+00> : vector<128x128xf32>
    %13 = tpu.matmul %11, %12, %cst_10 {dimension_numbers = #tpu.dot_dimension_numbers<[1], [0], [0], [1], [0, 0, 1, 1], [], []>} : vector<128x128xbf16>, vector<128x128xbf16>, vector<128x128xf32> -> vector<128x128xf32>
    %c0_11 = arith.constant 0 : index
    %c0_12 = arith.constant 0 : index
    %14 = vector.load %arg6[%c0_11, %c0_12] : memref<1x128xf32, #tpu.memory_space<vmem>>, vector<1x128xf32>
    %15 = vector.broadcast %14 : vector<1x128xf32> to vector<128x128xf32>
    %16 = arith.mulf %13, %15 : vector<128x128xf32>
    %c0_13 = arith.constant 0 : index
    %c0_14 = arith.constant 0 : index
    %17 = vector.load %arg7[%c0_13, %c0_14] : memref<1x128xf32, #tpu.memory_space<vmem>>, vector<1x128xf32>
    %18 = vector.broadcast %17 : vector<1x128xf32> to vector<128x128xf32>
    %19 = arith.addf %16, %18 : vector<128x128xf32>
    %cst_15 = arith.constant 0.000000e+00 : f32
    %20 = vector.broadcast %cst_15 : f32 to vector<128x128xf32>
    %21 = arith.maximumf %19, %20 : vector<128x128xf32>
    %22 = arith.truncf %21 : vector<128x128xf32> to vector<128x128xbf16>
    %c0_16 = arith.constant 0 : index
    %c0_17 = arith.constant 0 : index
    %23 = vector.load %arg8[%c0_16, %c0_17] : memref<128x128xbf16, #tpu.memory_space<vmem>>, vector<128x128xbf16>
    tpu.vector_store %arg8[%c0_16, %c0_17], %22 {strides = array<i32>} : memref<128x128xbf16, #tpu.memory_space<vmem>>, vector<128x128xbf16>,
    return
  }
  func.func @transform_0(%arg0: i32) -> (i32, i32) {
    %c0_i32 = arith.constant 0 : i32
    %c0_i32_0 = arith.constant 0 : i32
    return %arg0, %c0_i32 : i32, i32
  }
  func.func @transform_1(%arg0: i32) -> (i32, i32) {
    %c0_i32 = arith.constant 0 : i32
    %c0_i32_0 = arith.constant 0 : i32
    %c0_i32_1 = arith.constant 0 : i32
    return %c0_i32, %c0_i32_0 : i32, i32
  }
  func.func @transform_2(%arg0: i32) -> (i32, i32) {
    %c0_i32 = arith.constant 0 : i32
    %c0_i32_0 = arith.constant 0 : i32
    %c0_i32_1 = arith.constant 0 : i32
    return %c0_i32, %c0_i32_0 : i32, i32
  }
  func.func @transform_3(%arg0: i32) -> (i32, i32) {
    %c0_i32 = arith.constant 0 : i32
    %c0_i32_0 = arith.constant 0 : i32
    %c0_i32_1 = arith.constant 0 : i32
    return %c0_i32, %c0_i32_0 : i32, i32
  }
  func.func @transform_4(%arg0: i32) -> (i32, i32) {
    %c0_i32 = arith.constant 0 : i32
    %c0_i32_0 = arith.constant 0 : i32
    %c0_i32_1 = arith.constant 0 : i32
    return %c0_i32, %c0_i32_0 : i32, i32
  }
  func.func @transform_5(%arg0: i32) -> (i32, i32) {
    %c0_i32 = arith.constant 0 : i32
    %c0_i32_0 = arith.constant 0 : i32
    %c0_i32_1 = arith.constant 0 : i32
    return %c0_i32, %c0_i32_0 : i32, i32
  }
  func.func @transform_6(%arg0: i32) -> (i32, i32) {
    %c0_i32 = arith.constant 0 : i32
    %c0_i32_0 = arith.constant 0 : i32
    %c0_i32_1 = arith.constant 0 : i32
    return %c0_i32, %c0_i32_0 : i32, i32
  }
  func.func @transform_7(%arg0: i32) -> (i32, i32) {
    %c0_i32 = arith.constant 0 : i32
    %c0_i32_0 = arith.constant 0 : i32
    return %arg0, %c0_i32 : i32, i32
  }
}

</mosaic_0001>

<llo_original>
// kernel: tpu_custom_call.1
$region0: #{tpu_custom_call.1}
  #allocation0 [shape = 'u32[]', space=smem, size = 0x4, offset = 0x4, fixed_abs, tag = 'smem constant byte address 0x4 - core index']
  #allocation1 [shape = 'u32[144,128]{1,0:T(1,128)}', space=vmem, size = 0x12000, scoped, tag = 'internal scratch']
  %s0 = inlined_call_operand.hbm [shape: bf16[512,128], index: 0, kind: input, shape index: {}]
  %s1 = inlined_call_operand.hbm [shape: bf16[128,128], index: 1, kind: input, shape index: {}]
  %s2 = inlined_call_operand.vmem [shape: f32[1,128], index: 2, kind: input, shape index: {}]
  %s3 = inlined_call_operand.vmem [shape: f32[1,128], index: 3, kind: input, shape index: {}]
  %s4 = inlined_call_operand.hbm [shape: bf16[128,128], index: 4, kind: input, shape index: {}]
  %s5 = inlined_call_operand.vmem [shape: f32[1,128], index: 5, kind: input, shape index: {}]
  %s6 = inlined_call_operand.vmem [shape: f32[1,128], index: 6, kind: input, shape index: {}]
  %s7 = inlined_call_operand.hbm [shape: bf16[512,128], index: 7, kind: output, shape index: {}]
  %s8 = sld [smem:[#allocation0]]
  $region73: #{tpu_custom_call.1} parent=0
    _
  %s10 = ssub.s32 1, %s8
  %s11 = scalar_select 0, %s10, %s8
  $region1: #{tpu_custom_call.1} parent=0
    #allocation2 [shape = 'u8[65536]{0}', space=vmem, size = 0x10000, scoped, tag = 'input window, operand 0']
    #allocation3 [shape = 's32[2]{0}', space=sflag, size = 0x8, scoped, tag = 'scoped memory for tpu_custom_call.1']
    #allocation4 [shape = 's32[2]{0}', space=sflag, size = 0x8, scoped, tag = 'scoped memory for tpu_custom_call.1']
    #allocation5 [shape = 'u8[32768]{0}', space=vmem, size = 0x8000, scoped, tag = 'input window, operand 1, single buffered']
    #allocation6 [shape = 's32[1]{0}', space=sflag, size = 0x4, scoped, tag = 'scoped memory for tpu_custom_call.1']
    #allocation7 [shape = 'u8[32768]{0}', space=vmem, size = 0x8000, scoped, tag = 'input window, operand 4, single buffered']
    #allocation8 [shape = 'u8[65536]{0}', space=vmem, size = 0x10000, scoped, tag = 'output window, operand 0']
    %12 = vsyncpa [#allocation3], 0
    %s13 = scalar_lea.sflag [#allocation3], 1
    %14 = vsyncpa %s13, 0
    %15 = vsyncpa [#allocation6], 0
    %16 = vsyncpa [#allocation4], 0
    %s17 = scalar_lea.sflag [#allocation4], 1
    %18 = vsyncpa %s17, 0
    loop: start=0, step=1, limit=6
    $region2: #{tpu_custom_call.1} parent=1 // loop_pre_header
      _
    $region3: #{tpu_custom_call.1} parent=1 // loop_header
      %s20 = sphi 0, %s24
      %p21 = scmp.ge.s32.totalorder %s20, 6
      %s30 = sphi 0, %s32
      %s33 = sphi 0, %s30
      %s34 = sphi 0, %s33
      %s50 = sphi 0, %s34
      %s54 = sphi 0, %s54
      %s56 = sphi 0, %s54
      %s57 = sphi 0, %s56
      %s71 = sphi 0, %s57
      %s75 = sphi 0, %s75
      %s77 = sphi 0, %s75
      %s78 = sphi 0, %s77
      %s92 = sphi 0, %s78
      %s96 = sphi 0, %s96
      %s98 = sphi 0, %s96
      %s99 = sphi 0, %s98
      %s113 = sphi 0, %s99
      %s117 = sphi 0, %s117
      %s119 = sphi 0, %s117
      %s120 = sphi 0, %s119
      %s134 = sphi 0, %s120
      %s138 = sphi 0, %s138
      %s140 = sphi 0, %s138
      %s141 = sphi 0, %s140
      %s155 = sphi 0, %s141
      %s159 = sphi 0, %s159
      %s161 = sphi 0, %s159
      %s162 = sphi 0, %s161
      %s176 = sphi 0, %s162
      %s182 = sphi 0, %s184
      %s185 = sphi 0, %s182
      %s186 = sphi 0, %s185
      %s202 = sphi 0, %s186
    $region4: #{tpu_custom_call.1} parent=1 // loop_header_branch
      %23 = sbr.rel (%p21) target = $region8
    $region5: #{tpu_custom_call.1} parent=1 // loop_body
      %s25 = ssub.s32 %s20, 1
      %s26 = ssub.s32 %s20, 2
      %s27 = sadd.s32 %s20, 1
      %s28 = ssub.s32 %s20, %s27
      %p29 = scmp.eq.s32.totalorder %s28, 0
      %s31 = sadd.s32 %s30, 1
      %s32 = scalar_select %p29, %s30, %s31
      %p35 = pneg %p29
      %p36 = scmp.eq.s32.totalorder %s20, 3
      %p37 = por %p35, %p36
      %p38 = scmp.ne.s32.totalorder %s30, %s33
      %p39 = scmp.eq.s32.totalorder %s20, 0
      %p40 = por %p38, %p39
      %p41 = scmp.ne.s32.totalorder %s30, %s33
      %p42 = scmp.eq.s32.totalorder %s25, 3
      %p43 = por %p41, %p42
      %p44 = scmp.ne.s32.totalorder %s33, %s34
      %p45 = scmp.eq.s32.totalorder %s25, 0
      %p46 = por %p44, %p45
      %p47 = scmp.ne.s32.totalorder %s33, %s34
      %p48 = scmp.eq.s32.totalorder %s26, 3
      %p49 = por %p47, %p48
      %p51 = scmp.ne.s32.totalorder %s34, %s50
      %p52 = scmp.eq.s32.totalorder %s26, 0
      %p53 = por %p51, %p52
      %s55 = sadd.s32 %s54, 1
      %p58 = scmp.eq.s32.totalorder %s20, 3
      %p59 = scmp.ne.s32.totalorder %s54, %s56
      %p60 = scmp.eq.s32.totalorder %s20, 0
      %p61 = por %p59, %p60
      %p62 = scmp.ne.s32.totalorder %s54, %s56
      %p63 = scmp.eq.s32.totalorder %s25, 3
      %p64 = por %p62, %p63
      %p65 = scmp.ne.s32.totalorder %s56, %s57
      %p66 = scmp.eq.s32.totalorder %s25, 0
      %p67 = por %p65, %p66
      %p68 = scmp.ne.s32.totalorder %s56, %s57
      %p69 = scmp.eq.s32.totalorder %s26, 3
      %p70 = por %p68, %p69
      %p72 = scmp.ne.s32.totalorder %s57, %s71
      %p73 = scmp.eq.s32.totalorder %s26, 0
      %p74 = por %p72, %p73
      %s76 = sadd.s32 %s75, 1
      %p79 = scmp.eq.s32.totalorder %s20, 3
      %p80 = scmp.ne.s32.totalorder %s75, %s77
      %p81 = scmp.eq.s32.totalorder %s20, 0
      %p82 = por %p80, %p81
      %p83 = scmp.ne.s32.totalorder %s75, %s77
      %p84 = scmp.eq.s32.totalorder %s25, 3
      %p85 = por %p83, %p84
      %p86 = scmp.ne.s32.totalorder %s77, %s78
      %p87 = scmp.eq.s32.totalorder %s25, 0
      %p88 = por %p86, %p87
      %p89 = scmp.ne.s32.totalorder %s77, %s78
      %p90 = scmp.eq.s32.totalorder %s26, 3
      %p91 = por %p89, %p90
      %p93 = scmp.ne.s32.totalorder %s78, %s92
      %p94 = scmp.eq.s32.totalorder %s26, 0
      %p95 = por %p93, %p94
      %s97 = sadd.s32 %s96, 1
      %p100 = scmp.eq.s32.totalorder %s20, 3
      %p101 = scmp.ne.s32.totalorder %s96, %s98
      %p102 = scmp.eq.s32.totalorder %s20, 0
      %p103 = por %p101, %p102
      %p104 = scmp.ne.s32.totalorder %s96, %s98
      %p105 = scmp.eq.s32.totalorder %s25, 3
      %p106 = por %p104, %p105
      %p107 = scmp.ne.s32.totalorder %s98, %s99
      %p108 = scmp.eq.s32.totalorder %s25, 0
      %p109 = por %p107, %p108
      %p110 = scmp.ne.s32.totalorder %s98, %s99
      %p111 = scmp.eq.s32.totalorder %s26, 3
      %p112 = por %p110, %p111
      %p114 = scmp.ne.s32.totalorder %s99, %s113
      %p115 = scmp.eq.s32.totalorder %s26, 0
      %p116 = por %p114, %p115
      %s118 = sadd.s32 %s117, 1
      %p121 = scmp.eq.s32.totalorder %s20, 3
      %p122 = scmp.ne.s32.totalorder %s117, %s119
      %p123 = scmp.eq.s32.totalorder %s20, 0
      %p124 = por %p122, %p123
      %p125 = scmp.ne.s32.totalorder %s117, %s119
      %p126 = scmp.eq.s32.totalorder %s25, 3
      %p127 = por %p125, %p126
      %p128 = scmp.ne.s32.totalorder %s119, %s120
      %p129 = scmp.eq.s32.totalorder %s25, 0
      %p130 = por %p128, %p129
      %p131 = scmp.ne.s32.totalorder %s119, %s120
      %p132 = scmp.eq.s32.totalorder %s26, 3
      %p133 = por %p131, %p132
      %p135 = scmp.ne.s32.totalorder %s120, %s134
      %p136 = scmp.eq.s32.totalorder %s26, 0
      %p137 = por %p135, %p136
      %s139 = sadd.s32 %s138, 1
      %p142 = scmp.eq.s32.totalorder %s20, 3
      %p143 = scmp.ne.s32.totalorder %s138, %s140
      %p144 = scmp.eq.s32.totalorder %s20, 0
      %p145 = por %p143, %p144
      %p146 = scmp.ne.s32.totalorder %s138, %s140
      %p147 = scmp.eq.s32.totalorder %s25, 3
      %p148 = por %p146, %p147
      %p149 = scmp.ne.s32.totalorder %s140, %s141
      %p150 = scmp.eq.s32.totalorder %s25, 0
      %p151 = por %p149, %p150
      %p152 = scmp.ne.s32.totalorder %s140, %s141
      %p153 = scmp.eq.s32.totalorder %s26, 3
      %p154 = por %p152, %p153
      %p156 = scmp.ne.s32.totalorder %s141, %s155
      %p157 = scmp.eq.s32.totalorder %s26, 0
      %p158 = por %p156, %p157
      %s160 = sadd.s32 %s159, 1
      %p163 = scmp.eq.s32.totalorder %s20, 3
      %p164 = scmp.ne.s32.totalorder %s159, %s161
      %p165 = scmp.eq.s32.totalorder %s20, 0
      %p166 = por %p164, %p165
      %p167 = scmp.ne.s32.totalorder %s159, %s161
      %p168 = scmp.eq.s32.totalorder %s25, 3
      %p169 = por %p167, %p168
      %p170 = scmp.ne.s32.totalorder %s161, %s162
      %p171 = scmp.eq.s32.totalorder %s25, 0
      %p172 = por %p170, %p171
      %p173 = scmp.ne.s32.totalorder %s161, %s162
      %p174 = scmp.eq.s32.totalorder %s26, 3
      %p175 = por %p173, %p174
      %p177 = scmp.ne.s32.totalorder %s162, %s176
      %p178 = scmp.eq.s32.totalorder %s26, 0
      %p179 = por %p177, %p178
      %s180 = ssub.s32 %s20, %s27
      %p181 = scmp.eq.s32.totalorder %s180, 0
      %s183 = sadd.s32 %s182, 1
      %s184 = scalar_select %p181, %s182, %s183
      %p187 = pneg %p181
      %p188 = scmp.eq.s32.totalorder %s20, 3
      %p189 = por %p187, %p188
      %p190 = scmp.ne.s32.totalorder %s182, %s185
      %p191 = scmp.eq.s32.totalorder %s20, 0
      %p192 = por %p190, %p191
      %p193 = scmp.ne.s32.totalorder %s182, %s185
      %p194 = scmp.eq.s32.totalorder %s25, 3
      %p195 = por %p193, %p194
      %p196 = scmp.ne.s32.totalorder %s185, %s186
      %p197 = scmp.eq.s32.totalorder %s25, 0
      %p198 = por %p196, %p197
      %p199 = scmp.ne.s32.totalorder %s185, %s186
      %p200 = scmp.eq.s32.totalorder %s26, 3
      %p201 = por %p199, %p200
      %p203 = scmp.ne.s32.totalorder %s186, %s202
      %p204 = scmp.eq.s32.totalorder %s26, 0
      %p205 = por %p203, %p204
      %p206 = scmp.le.s32.totalorder 1, %s20
      %p207 = scmp.lt.s32.totalorder %s20, 5
      %p208 = pnand %p206, %p207
      %p209 = pneg %p208
      // Predicated region
      $region9: #{tpu_custom_call.1} parent=5 // pred_check
        _
      $region10: #{tpu_custom_call.1} parent=5 // pred_check_branch
        %211 = sbr.rel (%p208) target = $region12
      $region11: #{tpu_custom_call.1} parent=5 // pred_region
        %s212 = ssub.s32 %s20, 1
        // Predicated region
        $region13: #{tpu_custom_call.1} parent=11 // pred_check
          %p213 = pneg %p67
        $region14: #{tpu_custom_call.1} parent=11 // pred_check_branch
          %215 = sbr.rel (%p213) target = $region16
        $region15: #{tpu_custom_call.1} parent=11 // pred_region
          %s217 = ssub.s32 1024, 1024
          %218 = vsyncadd [#allocation6], %s217
          %s219 = sshll.u32 [#allocation5], 4
          %s220 = int_to_ptr.vmem [resolvable:$true] %s219
          %225 = dma.hbm_to_vmem [thread:$0]  %s1, 1024, %s220, [#allocation6], 64, 64, 4
        $region16: #{tpu_custom_call.1} parent=11 // pred_fallthru
          _
        // Predicated region
        $region17: #{tpu_custom_call.1} parent=11 // pred_check
          %p226 = pneg %p88
        $region18: #{tpu_custom_call.1} parent=11 // pred_check_branch
          %228 = sbr.rel (%p226) target = $region20
        $region19: #{tpu_custom_call.1} parent=11 // pred_region
          _
        $region20: #{tpu_custom_call.1} parent=11 // pred_fallthru
          _
        // Predicated region
        $region21: #{tpu_custom_call.1} parent=11 // pred_check
          %p229 = pneg %p109
        $region22: #{tpu_custom_call.1} parent=11 // pred_check_branch
          %231 = sbr.rel (%p229) target = $region24
        $region23: #{tpu_custom_call.1} parent=11 // pred_region
          _
        $region24: #{tpu_custom_call.1} parent=11 // pred_fallthru
          _
        // Predicated region
        $region25: #{tpu_custom_call.1} parent=11 // pred_check
          %p232 = pneg %p130
        $region26: #{tpu_custom_call.1} parent=11 // pred_check_branch
          %234 = sbr.rel (%p232) target = $region28
        $region27: #{tpu_custom_call.1} parent=11 // pred_region
          %s236 = ssub.s32 1024, 1024
          %237 = vsyncadd [#allocation6], %s236
          %s238 = sshll.u32 [#allocation7], 4
          %s239 = int_to_ptr.vmem [resolvable:$true] %s238
          %244 = dma.hbm_to_vmem [thread:$0]  %s4, 1024, %s239, [#allocation6], 64, 64, 4
        $region28: #{tpu_custom_call.1} parent=11 // pred_fallthru
          _
        // Predicated region
        $region29: #{tpu_custom_call.1} parent=11 // pred_check
          %p245 = pneg %p151
        $region30: #{tpu_custom_call.1} parent=11 // pred_check_branch
          %247 = sbr.rel (%p245) target = $region32
        $region31: #{tpu_custom_call.1} parent=11 // pred_region
          _
        $region32: #{tpu_custom_call.1} parent=11 // pred_fallthru
          _
        // Predicated region
        $region33: #{tpu_custom_call.1} parent=11 // pred_check
          %p248 = pneg %p172
        $region34: #{tpu_custom_call.1} parent=11 // pred_check_branch
          %250 = sbr.rel (%p248) target = $region36
        $region35: #{tpu_custom_call.1} parent=11 // pred_region
          _
        $region36: #{tpu_custom_call.1} parent=11 // pred_fallthru
          _
      $region12: #{tpu_custom_call.1} parent=5 // pred_fallthru
        _
      %p251 = scmp.lt.s32.totalorder %s20, 4
      // Predicated region
      $region37: #{tpu_custom_call.1} parent=5 // pred_check
        %p252 = pneg %p251
      $region38: #{tpu_custom_call.1} parent=5 // pred_check_branch
        %254 = sbr.rel (%p252) target = $region40
      $region39: #{tpu_custom_call.1} parent=5 // pred_region
        // Predicated region
        $region41: #{tpu_custom_call.1} parent=39 // pred_check
          %p255 = pneg %p40
        $region42: #{tpu_custom_call.1} parent=39 // pred_check_branch
          %257 = sbr.rel (%p255) target = $region44
        $region43: #{tpu_custom_call.1} parent=39 // pred_region
          %s258 = sand.u32 %s30, 1
          %s259 = scalar_lea.sflag [#allocation3], %s258
          %s260 = sand.u32 %s30, 1
          %s261 = smul.addr %s260, 64
          %s262 = scalar_lea.vmem [#allocation2], %s261
          %s263 = smul.u32 16, %s20
          %s265 = ssub.s32 1024, 1024
          %266 = vsyncadd %s259, %s265
          %s267 = smul.addr %s263, 64
          %s268 = scalar_lea.hbm %s0, %s267
          %s269 = sshll.u32 %s262, 4
          %s270 = int_to_ptr.vmem [resolvable:$true] %s269
          %275 = dma.hbm_to_vmem [thread:$0]  %s268, 1024, %s270, %s259, 64, 64, 4
        $region44: #{tpu_custom_call.1} parent=39 // pred_fallthru
          _
      $region40: #{tpu_custom_call.1} parent=5 // pred_fallthru
        _
      %p276 = scmp.le.s32.totalorder 1, %s20
      %p277 = scmp.lt.s32.totalorder %s20, 5
      %p278 = pnand %p276, %p277
      %p279 = pneg %p278
      // Predicated region
      $region45: #{tpu_custom_call.1} parent=5 // pred_check
        _
      $region46: #{tpu_custom_call.1} parent=5 // pred_check_branch
        %281 = sbr.rel (%p278) target = $region48
      $region47: #{tpu_custom_call.1} parent=5 // pred_region
        %s282 = ssub.s32 %s20, 1
        %s283 = sand.u32 %s33, 1
        %s284 = scalar_lea.sflag [#allocation3], %s283
        %s285 = sand.u32 %s33, 1
        %s286 = smul.addr %s285, 64
        %s287 = scalar_lea.vmem [#allocation2], %s286
        // Predicated region
        $region49: #{tpu_custom_call.1} parent=47 // pred_check
          %p288 = pneg %p46
        $region50: #{tpu_custom_call.1} parent=47 // pred_check_branch
          %290 = sbr.rel (%p288) target = $region52
        $region51: #{tpu_custom_call.1} parent=47 // pred_region
          %291 = dma.done %s284, 1024
        $region52: #{tpu_custom_call.1} parent=47 // pred_fallthru
          _
        // Predicated region
        $region53: #{tpu_custom_call.1} parent=47 // pred_check
          %p292 = pneg %p67
        $region54: #{tpu_custom_call.1} parent=47 // pred_check_branch
          %294 = sbr.rel (%p292) target = $region56
        $region55: #{tpu_custom_call.1} parent=47 // pred_region
          %295 = dma.done [#allocation6], 1024
        $region56: #{tpu_custom_call.1} parent=47 // pred_fallthru
          _
        // Predicated region
        $region57: #{tpu_custom_call.1} parent=47 // pred_check
          %p296 = pneg %p130
        $region58: #{tpu_custom_call.1} parent=47 // pred_check_branch
          %298 = sbr.rel (%p296) target = $region60
        $region59: #{tpu_custom_call.1} parent=47 // pred_region
          %299 = dma.done [#allocation6], 1024
        $region60: #{tpu_custom_call.1} parent=47 // pred_fallthru
          _
        %s300 = sand.u32 %s33, 1
        %s301 = scalar_lea.sflag [#allocation3], %s300
        %s302 = sand.u32 %s33, 1
        %s303 = smul.addr %s302, 64
        %s304 = scalar_lea.vmem [#allocation2], %s303
        %p305 = pneg %p46
        %p306 = pneg %p43
        %p307 = pneg %p67
        %p308 = pneg %p64
        %p309 = pneg %p88
        %p310 = pneg %p85
        %p311 = pneg %p109
        %p312 = pneg %p106
        %p313 = pneg %p130
        %p314 = pneg %p127
        %p315 = pneg %p151
        %p316 = pneg %p148
        %p317 = pneg %p172
        %p318 = pneg %p169
        %p319 = pneg %p198
        %p320 = pneg %p195
        %s321 = sand.u32 %s185, 1
        %s322 = scalar_lea.sflag [#allocation4], %s321
        %s323 = sand.u32 %s185, 1
        %s324 = smul.addr %s323, 64
        %s325 = scalar_lea.vmem [#allocation8], %s324
        %s326 = smul.u32 16, %s25
        %s327 = smul.u32 16, %s25
        %v329 = vld [vmem:[%s287] sm:$0xf]
        %v330 = vld [vmem:[%s287 + $0x4] sm:$0xf]
        %v331 = vld [vmem:[%s287 + $0x8] sm:$0xf]
        %v332 = vld [vmem:[%s287 + $0xc] sm:$0xf]
        %v333 = vld [vmem:[%s287 + $0x10] sm:$0xf]
        %v334 = vld [vmem:[%s287 + $0x14] sm:$0xf]
        %v335 = vld [vmem:[%s287 + $0x18] sm:$0xf]
        %v336 = vld [vmem:[%s287 + $0x1c] sm:$0xf]
        %v337 = vld [vmem:[%s287 + $0x20] sm:$0xf]
        %v338 = vld [vmem:[%s287 + $0x24] sm:$0xf]
        %v339 = vld [vmem:[%s287 + $0x28] sm:$0xf]
        %v340 = vld [vmem:[%s287 + $0x2c] sm:$0xf]
        %v341 = vld [vmem:[%s287 + $0x30] sm:$0xf]
        %v342 = vld [vmem:[%s287 + $0x34] sm:$0xf]
        %v343 = vld [vmem:[%s287 + $0x38] sm:$0xf]
        %v344 = vld [vmem:[%s287 + $0x3c] sm:$0xf]
        %v345 = vld [vmem:[#allocation5] sm:$0xf]
        %v346 = vld [vmem:[#allocation5 + $0x4] sm:$0xf]
        %v347 = vld [vmem:[#allocation5 + $0x8] sm:$0xf]
        %v348 = vld [vmem:[#allocation5 + $0xc] sm:$0xf]
        %v349 = vld [vmem:[#allocation5 + $0x10] sm:$0xf]
        %v350 = vld [vmem:[#allocation5 + $0x14] sm:$0xf]
        %v351 = vld [vmem:[#allocation5 + $0x18] sm:$0xf]
        %v352 = vld [vmem:[#allocation5 + $0x1c] sm:$0xf]
        %v353 = vld [vmem:[#allocation5 + $0x20] sm:$0xf]
        %v354 = vld [vmem:[#allocation5 + $0x24] sm:$0xf]
        %v355 = vld [vmem:[#allocation5 + $0x28] sm:$0xf]
        %v356 = vld [vmem:[#allocation5 + $0x2c] sm:$0xf]
        %v357 = vld [vmem:[#allocation5 + $0x30] sm:$0xf]
        %v358 = vld [vmem:[#allocation5 + $0x34] sm:$0xf]
        %v359 = vld [vmem:[#allocation5 + $0x38] sm:$0xf]
        %v360 = vld [vmem:[#allocation5 + $0x3c] sm:$0xf]
        %v377 = vunpack.c.l.b16 %v329
        %v378 = vunpack.c.l.b16 %v330
        %v379 = vunpack.c.l.b16 %v331
        %v380 = vunpack.c.l.b16 %v332
        %v381 = vunpack.c.l.b16 %v333
        %v382 = vunpack.c.l.b16 %v334
        %v383 = vunpack.c.l.b16 %v335
        %v384 = vunpack.c.l.b16 %v336
        %v385 = vunpack.c.l.b16 %v337
        %v386 = vunpack.c.l.b16 %v338
        %v387 = vunpack.c.l.b16 %v339
        %v388 = vunpack.c.l.b16 %v340
        %v389 = vunpack.c.l.b16 %v341
        %v390 = vunpack.c.l.b16 %v342
        %v391 = vunpack.c.l.b16 %v343
        %v392 = vunpack.c.l.b16 %v344
        %v393 = vpack.c.b16 %v378, %v377
        %v394 = vpack.c.b16 %v380, %v379
        %v395 = vpack.c.b16 %v382, %v381
        %v396 = vpack.c.b16 %v384, %v383
        %v397 = vpack.c.b16 %v386, %v385
        %v398 = vpack.c.b16 %v388, %v387
        %v399 = vpack.c.b16 %v390, %v389
        %v400 = vpack.c.b16 %v392, %v391
        %v425 = vunpack.c.l.b16 %v345
        %v426 = vunpack.c.l.b16 %v346
        %v427 = vunpack.c.l.b16 %v347
        %v428 = vunpack.c.l.b16 %v348
        %v429 = vunpack.c.l.b16 %v349
        %v430 = vunpack.c.l.b16 %v350
        %v431 = vunpack.c.l.b16 %v351
        %v432 = vunpack.c.l.b16 %v352
        %v433 = vunpack.c.l.b16 %v353
        %v434 = vunpack.c.l.b16 %v354
        %v435 = vunpack.c.l.b16 %v355
        %v436 = vunpack.c.l.b16 %v356
        %v437 = vunpack.c.l.b16 %v357
        %v438 = vunpack.c.l.b16 %v358
        %v439 = vunpack.c.l.b16 %v359
        %v440 = vunpack.c.l.b16 %v360
        %v441 = vpack.c.b16 %v426, %v425
        %v442 = vpack.c.b16 %v428, %v427
        %v443 = vpack.c.b16 %v430, %v429
        %v444 = vpack.c.b16 %v432, %v431
        %v445 = vpack.c.b16 %v434, %v433
        %v446 = vpack.c.b16 %v436, %v435
        %v447 = vpack.c.b16 %v438, %v437
        %v448 = vpack.c.b16 %v440, %v439
        %457 = vmatprep.subr.bf16.mxu0 0
        %458 = vmatpush1.bf16.msra.mxu0 %v448
        %459 = vmatprep.subr.bf16.mxu0 0
        %460 = vmatpush1.bf16.msra.mxu0 %v447
        %461 = vmatprep.subr.bf16.mxu0 0
        %462 = vmatpush1.bf16.msra.mxu0 %v446
        %463 = vmatprep.subr.bf16.mxu0 0
        %464 = vmatpush1.bf16.msra.mxu0 %v445
        %465 = vmatprep.subr.bf16.mxu0 0
        %466 = vmatpush1.bf16.msra.mxu0 %v444
        %467 = vmatprep.subr.bf16.mxu0 0
        %468 = vmatpush1.bf16.msra.mxu0 %v443
        %469 = vmatprep.subr.bf16.mxu0 0
        %470 = vmatpush1.bf16.msra.mxu0 %v442
        %471 = vmatprep.subr.bf16.mxu0 0
        %472 = vmatpush1.bf16.msra.mxu0 %v441
        %473 = vmatprep.subr.bf16.mxu0 0
        %474 = vmatpush2.bf16.msra.mxu0 0
        %475 = vmatprep.subr.bf16.mxu0 0
        %476 = vmatpush2.bf16.msra.mxu0 0
        %477 = vmatprep.subr.bf16.mxu0 0
        %478 = vmatpush2.bf16.msra.mxu0 0
        %479 = vmatprep.subr.bf16.mxu0 0
        %480 = vmatpush2.bf16.msra.mxu0 0
        %481 = vmatprep.subr.bf16.mxu0 0
        %482 = vmatpush2.bf16.msra.mxu0 0
        %483 = vmatprep.subr.bf16.mxu0 0
        %484 = vmatpush2.bf16.msra.mxu0 0
        %485 = vmatprep.subr.bf16.mxu0 0
        %486 = vmatpush2.bf16.msra.mxu0 0
        %487 = vmatprep.subr.bf16.mxu0 0
        %488 = vmatpush2.bf16.msra.mxu0 0
        %489 = vmatprep.mubr.bf16.mxu0 0
        %490 = vmatmul.mubr.bf16.gmra.mxu0 %v393
        %v491 = vpop.f32.mrf.mxu0
        %v492 = vadd.f32 0.0, %v491
        %v493 = vpop.f32.mrf.mxu0
        %v494 = vpop.f32.mrf.mxu0
        %v495 = vadd.f32 0.0, %v494
        %v496 = vpop.f32.mrf.mxu0
        %497 = vmatprep.mubr.bf16.mxu0 0
        %498 = vmatmul.mubr.bf16.gmra.mxu0 %v394
        %v499 = vpop.f32.mrf.mxu0
        %v500 = vadd.f32 0.0, %v499
        %v501 = vpop.f32.mrf.mxu0
        %v502 = vpop.f32.mrf.mxu0
        %v503 = vadd.f32 0.0, %v502
        %v504 = vpop.f32.mrf.mxu0
        %505 = vmatprep.mubr.bf16.mxu0 0
        %506 = vmatmul.mubr.bf16.gmra.mxu0 %v395
        %v507 = vpop.f32.mrf.mxu0
        %v508 = vadd.f32 0.0, %v507
        %v509 = vpop.f32.mrf.mxu0
        %v510 = vpop.f32.mrf.mxu0
        %v511 = vadd.f32 0.0, %v510
        %v512 = vpop.f32.mrf.mxu0
        %513 = vmatprep.mubr.bf16.mxu0 0
        %514 = vmatmul.mubr.bf16.gmra.mxu0 %v396
        %v515 = vpop.f32.mrf.mxu0
        %v516 = vadd.f32 0.0, %v515
        %v517 = vpop.f32.mrf.mxu0
        %v518 = vpop.f32.mrf.mxu0
        %v519 = vadd.f32 0.0, %v518
        %v520 = vpop.f32.mrf.mxu0
        %521 = vmatprep.mubr.bf16.mxu0 0
        %522 = vmatmul.mubr.bf16.gmra.mxu0 %v397
        %v523 = vpop.f32.mrf.mxu0
        %v524 = vadd.f32 0.0, %v523
        %v525 = vpop.f32.mrf.mxu0
        %v526 = vpop.f32.mrf.mxu0
        %v527 = vadd.f32 0.0, %v526
        %v528 = vpop.f32.mrf.mxu0
        %529 = vmatprep.mubr.bf16.mxu0 0
        %530 = vmatmul.mubr.bf16.gmra.mxu0 %v398
        %v531 = vpop.f32.mrf.mxu0
        %v532 = vadd.f32 0.0, %v531
        %v533 = vpop.f32.mrf.mxu0
        %v534 = vpop.f32.mrf.mxu0
        %v535 = vadd.f32 0.0, %v534
        %v536 = vpop.f32.mrf.mxu0
        %537 = vmatprep.mubr.bf16.mxu0 0
        %538 = vmatmul.mubr.bf16.gmra.mxu0 %v399
        %v539 = vpop.f32.mrf.mxu0
        %v540 = vadd.f32 0.0, %v539
        %v541 = vpop.f32.mrf.mxu0
        %v542 = vpop.f32.mrf.mxu0
        %v543 = vadd.f32 0.0, %v542
        %v544 = vpop.f32.mrf.mxu0
        %545 = vmatprep.mubr.bf16.mxu0 0
        %546 = vmatmul.mubr.bf16.gmra.mxu0 %v400
        %v547 = vpop.f32.mrf.mxu0
        %v548 = vadd.f32 0.0, %v547
        %v549 = vpop.f32.mrf.mxu0
        %v550 = vpop.f32.mrf.mxu0
        %v551 = vadd.f32 0.0, %v550
        %v552 = vpop.f32.mrf.mxu0
        %553 = vdwg.mxu0
        %v554 = vld [vmem:[%s2] sm:$0x1]
        %v556 = vlaneseq
        %v557 = vshrl.u32 %v556, 7
        %v558 = vsub.s32 0, %v557
        %v559 = vrot.slane %v554, %v558
        %v561 = vmul.f32 %v492, %v559
        %v562 = vmul.f32 %v495, %v559
        %v563 = vmul.f32 %v500, %v559
        %v564 = vmul.f32 %v503, %v559
        %v565 = vmul.f32 %v508, %v559
        %v566 = vmul.f32 %v511, %v559
        %v567 = vmul.f32 %v516, %v559
        %v568 = vmul.f32 %v519, %v559
        %v569 = vmul.f32 %v524, %v559
        %v570 = vmul.f32 %v527, %v559
        %v571 = vmul.f32 %v532, %v559
        %v572 = vmul.f32 %v535, %v559
        %v573 = vmul.f32 %v540, %v559
        %v574 = vmul.f32 %v543, %v559
        %v575 = vmul.f32 %v548, %v559
        %v576 = vmul.f32 %v551, %v559
        %v577 = vld [vmem:[%s3] sm:$0x1]
        %v579 = vlaneseq
        %v580 = vshrl.u32 %v579, 7
        %v581 = vsub.s32 0, %v580
        %v582 = vrot.slane %v577, %v581
        %v584 = vadd.f32 %v561, %v582
        %v585 = vadd.f32 %v562, %v582
        %v586 = vadd.f32 %v563, %v582
        %v587 = vadd.f32 %v564, %v582
        %v588 = vadd.f32 %v565, %v582
        %v589 = vadd.f32 %v566, %v582
        %v590 = vadd.f32 %v567, %v582
        %v591 = vadd.f32 %v568, %v582
        %v592 = vadd.f32 %v569, %v582
        %v593 = vadd.f32 %v570, %v582
        %v594 = vadd.f32 %v571, %v582
        %v595 = vadd.f32 %v572, %v582
        %v596 = vadd.f32 %v573, %v582
        %v597 = vadd.f32 %v574, %v582
        %v598 = vadd.f32 %v575, %v582
        %v599 = vadd.f32 %v576, %v582
        %v600 = vmax.f32 %v584, 0.0
        %v601 = vmax.f32 %v585, 0.0
        %v602 = vmax.f32 %v586, 0.0
        %v603 = vmax.f32 %v587, 0.0
        %v604 = vmax.f32 %v588, 0.0
        %v605 = vmax.f32 %v589, 0.0
        %v606 = vmax.f32 %v590, 0.0
        %v607 = vmax.f32 %v591, 0.0
        %v608 = vmax.f32 %v592, 0.0
        %v609 = vmax.f32 %v593, 0.0
        %v610 = vmax.f32 %v594, 0.0
        %v611 = vmax.f32 %v595, 0.0
        %v612 = vmax.f32 %v596, 0.0
        %v613 = vmax.f32 %v597, 0.0
        %v614 = vmax.f32 %v598, 0.0
        %v615 = vmax.f32 %v599, 0.0
        %v616 = vpack.c.bf16 %v601, %v600
        %v617 = vpack.c.bf16 %v603, %v602
        %v618 = vpack.c.bf16 %v605, %v604
        %v619 = vpack.c.bf16 %v607, %v606
        %v620 = vpack.c.bf16 %v609, %v608
        %v621 = vpack.c.bf16 %v611, %v610
        %v622 = vpack.c.bf16 %v613, %v612
        %v623 = vpack.c.bf16 %v615, %v614
        %v624 = vld [vmem:[#allocation7] sm:$0xf]
        %v625 = vld [vmem:[#allocation7 + $0x4] sm:$0xf]
        %v626 = vld [vmem:[#allocation7 + $0x8] sm:$0xf]
        %v627 = vld [vmem:[#allocation7 + $0xc] sm:$0xf]
        %v628 = vld [vmem:[#allocation7 + $0x10] sm:$0xf]
        %v629 = vld [vmem:[#allocation7 + $0x14] sm:$0xf]
        %v630 = vld [vmem:[#allocation7 + $0x18] sm:$0xf]
        %v631 = vld [vmem:[#allocation7 + $0x1c] sm:$0xf]
        %v632 = vld [vmem:[#allocation7 + $0x20] sm:$0xf]
        %v633 = vld [vmem:[#allocation7 + $0x24] sm:$0xf]
        %v634 = vld [vmem:[#allocation7 + $0x28] sm:$0xf]
        %v635 = vld [vmem:[#allocation7 + $0x2c] sm:$0xf]
        %v636 = vld [vmem:[#allocation7 + $0x30] sm:$0xf]
        %v637 = vld [vmem:[#allocation7 + $0x34] sm:$0xf]
        %v638 = vld [vmem:[#allocation7 + $0x38] sm:$0xf]
        %v639 = vld [vmem:[#allocation7 + $0x3c] sm:$0xf]
        %v656 = vunpack.c.l.b16 %v624
        %v657 = vunpack.c.l.b16 %v625
        %v658 = vunpack.c.l.b16 %v626
        %v659 = vunpack.c.l.b16 %v627
        %v660 = vunpack.c.l.b16 %v628
        %v661 = vunpack.c.l.b16 %v629
        %v662 = vunpack.c.l.b16 %v630
        %v663 = vunpack.c.l.b16 %v631
        %v664 = vunpack.c.l.b16 %v632
        %v665 = vunpack.c.l.b16 %v633
        %v666 = vunpack.c.l.b16 %v634
        %v667 = vunpack.c.l.b16 %v635
        %v668 = vunpack.c.l.b16 %v636
        %v669 = vunpack.c.l.b16 %v637
        %v670 = vunpack.c.l.b16 %v638
        %v671 = vunpack.c.l.b16 %v639
        %v672 = vpack.c.b16 %v657, %v656
        %v673 = vpack.c.b16 %v659, %v658
        %v674 = vpack.c.b16 %v661, %v660
        %v675 = vpack.c.b16 %v663, %v662
        %v676 = vpack.c.b16 %v665, %v664
        %v677 = vpack.c.b16 %v667, %v666
        %v678 = vpack.c.b16 %v669, %v668
        %v679 = vpack.c.b16 %v671, %v670
        %688 = vmatprep.subr.bf16.mxu0 0
        %689 = vmatpush1.bf16.msra.mxu0 %v679
        %690 = vmatprep.subr.bf16.mxu0 0
        %691 = vmatpush1.bf16.msra.mxu0 %v678
        %692 = vmatprep.subr.bf16.mxu0 0
        %693 = vmatpush1.bf16.msra.mxu0 %v677
        %694 = vmatprep.subr.bf16.mxu0 0
        %695 = vmatpush1.bf16.msra.mxu0 %v676
        %696 = vmatprep.subr.bf16.mxu0 0
        %697 = vmatpush1.bf16.msra.mxu0 %v675
        %698 = vmatprep.subr.bf16.mxu0 0
        %699 = vmatpush1.bf16.msra.mxu0 %v674
        %700 = vmatprep.subr.bf16.mxu0 0
        %701 = vmatpush1.bf16.msra.mxu0 %v673
        %702 = vmatprep.subr.bf16.mxu0 0
        %703 = vmatpush1.bf16.msra.mxu0 %v672
        %704 = vmatprep.subr.bf16.mxu0 0
        %705 = vmatpush2.bf16.msra.mxu0 0
        %706 = vmatprep.subr.bf16.mxu0 0
        %707 = vmatpush2.bf16.msra.mxu0 0
        %708 = vmatprep.subr.bf16.mxu0 0
        %709 = vmatpush2.bf16.msra.mxu0 0
        %710 = vmatprep.subr.bf16.mxu0 0
        %711 = vmatpush2.bf16.msra.mxu0 0
        %712 = vmatprep.subr.bf16.mxu0 0
        %713 = vmatpush2.bf16.msra.mxu0 0
        %714 = vmatprep.subr.bf16.mxu0 0
        %715 = vmatpush2.bf16.msra.mxu0 0
        %716 = vmatprep.subr.bf16.mxu0 0
        %717 = vmatpush2.bf16.msra.mxu0 0
        %718 = vmatprep.subr.bf16.mxu0 0
        %719 = vmatpush2.bf16.msra.mxu0 0
        %720 = vmatprep.mubr.bf16.mxu0 0
        %721 = vmatmul.mubr.bf16.gmra.mxu0 %v616
        %v722 = vpop.f32.mrf.mxu0
        %v723 = vadd.f32 0.0, %v722
        %v724 = vpop.f32.mrf.mxu0
        %v725 = vpop.f32.mrf.mxu0
        %v726 = vadd.f32 0.0, %v725
        %v727 = vpop.f32.mrf.mxu0
        %728 = vmatprep.mubr.bf16.mxu0 0
        %729 = vmatmul.mubr.bf16.gmra.mxu0 %v617
        %v730 = vpop.f32.mrf.mxu0
        %v731 = vadd.f32 0.0, %v730
        %v732 = vpop.f32.mrf.mxu0
        %v733 = vpop.f32.mrf.mxu0
        %v734 = vadd.f32 0.0, %v733
        %v735 = vpop.f32.mrf.mxu0
        %736 = vmatprep.mubr.bf16.mxu0 0
        %737 = vmatmul.mubr.bf16.gmra.mxu0 %v618
        %v738 = vpop.f32.mrf.mxu0
        %v739 = vadd.f32 0.0, %v738
        %v740 = vpop.f32.mrf.mxu0
        %v741 = vpop.f32.mrf.mxu0
        %v742 = vadd.f32 0.0, %v741
        %v743 = vpop.f32.mrf.mxu0
        %744 = vmatprep.mubr.bf16.mxu0 0
        %745 = vmatmul.mubr.bf16.gmra.mxu0 %v619
        %v746 = vpop.f32.mrf.mxu0
        %v747 = vadd.f32 0.0, %v746
        %v748 = vpop.f32.mrf.mxu0
        %v749 = vpop.f32.mrf.mxu0
        %v750 = vadd.f32 0.0, %v749
        %v751 = vpop.f32.mrf.mxu0
        %752 = vmatprep.mubr.bf16.mxu0 0
        %753 = vmatmul.mubr.bf16.gmra.mxu0 %v620
        %v754 = vpop.f32.mrf.mxu0
        %v755 = vadd.f32 0.0, %v754
        %v756 = vpop.f32.mrf.mxu0
        %v757 = vpop.f32.mrf.mxu0
        %v758 = vadd.f32 0.0, %v757
        %v759 = vpop.f32.mrf.mxu0
        %760 = vmatprep.mubr.bf16.mxu0 0
        %761 = vmatmul.mubr.bf16.gmra.mxu0 %v621
        %v762 = vpop.f32.mrf.mxu0
        %v763 = vadd.f32 0.0, %v762
        %v764 = vpop.f32.mrf.mxu0
        %v765 = vpop.f32.mrf.mxu0
        %v766 = vadd.f32 0.0, %v765
        %v767 = vpop.f32.mrf.mxu0
        %768 = vmatprep.mubr.bf16.mxu0 0
        %769 = vmatmul.mubr.bf16.gmra.mxu0 %v622
        %v770 = vpop.f32.mrf.mxu0
        %v771 = vadd.f32 0.0, %v770
        %v772 = vpop.f32.mrf.mxu0
        %v773 = vpop.f32.mrf.mxu0
        %v774 = vadd.f32 0.0, %v773
        %v775 = vpop.f32.mrf.mxu0
        %776 = vmatprep.mubr.bf16.mxu0 0
        %777 = vmatmul.mubr.bf16.gmra.mxu0 %v623
        %v778 = vpop.f32.mrf.mxu0
        %v779 = vadd.f32 0.0, %v778
        %v780 = vpop.f32.mrf.mxu0
        %v781 = vpop.f32.mrf.mxu0
        %v782 = vadd.f32 0.0, %v781
        %v783 = vpop.f32.mrf.mxu0
        %784 = vdwg.mxu0
        %v785 = vld [vmem:[%s5] sm:$0x1]
        %v787 = vlaneseq
        %v788 = vshrl.u32 %v787, 7
        %v789 = vsub.s32 0, %v788
        %v790 = vrot.slane %v785, %v789
        %v792 = vmul.f32 %v723, %v790
        %v793 = vmul.f32 %v726, %v790
        %v794 = vmul.f32 %v731, %v790
        %v795 = vmul.f32 %v734, %v790
        %v796 = vmul.f32 %v739, %v790
        %v797 = vmul.f32 %v742, %v790
        %v798 = vmul.f32 %v747, %v790
        %v799 = vmul.f32 %v750, %v790
        %v800 = vmul.f32 %v755, %v790
        %v801 = vmul.f32 %v758, %v790
        %v802 = vmul.f32 %v763, %v790
        %v803 = vmul.f32 %v766, %v790
        %v804 = vmul.f32 %v771, %v790
        %v805 = vmul.f32 %v774, %v790
        %v806 = vmul.f32 %v779, %v790
        %v807 = vmul.f32 %v782, %v790
        %v808 = vld [vmem:[%s6] sm:$0x1]
        %v810 = vlaneseq
        %v811 = vshrl.u32 %v810, 7
        %v812 = vsub.s32 0, %v811
        %v813 = vrot.slane %v808, %v812
        %v815 = vadd.f32 %v792, %v813
        %v816 = vadd.f32 %v793, %v813
        %v817 = vadd.f32 %v794, %v813
        %v818 = vadd.f32 %v795, %v813
        %v819 = vadd.f32 %v796, %v813
        %v820 = vadd.f32 %v797, %v813
        %v821 = vadd.f32 %v798, %v813
        %v822 = vadd.f32 %v799, %v813
        %v823 = vadd.f32 %v800, %v813
        %v824 = vadd.f32 %v801, %v813
        %v825 = vadd.f32 %v802, %v813
        %v826 = vadd.f32 %v803, %v813
        %v827 = vadd.f32 %v804, %v813
        %v828 = vadd.f32 %v805, %v813
        %v829 = vadd.f32 %v806, %v813
        %v830 = vadd.f32 %v807, %v813
        %v831 = vmax.f32 %v815, 0.0
        %v832 = vmax.f32 %v816, 0.0
        %v833 = vmax.f32 %v817, 0.0
        %v834 = vmax.f32 %v818, 0.0
        %v835 = vmax.f32 %v819, 0.0
        %v836 = vmax.f32 %v820, 0.0
        %v837 = vmax.f32 %v821, 0.0
        %v838 = vmax.f32 %v822, 0.0
        %v839 = vmax.f32 %v823, 0.0
        %v840 = vmax.f32 %v824, 0.0
        %v841 = vmax.f32 %v825, 0.0
        %v842 = vmax.f32 %v826, 0.0
        %v843 = vmax.f32 %v827, 0.0
        %v844 = vmax.f32 %v828, 0.0
        %v845 = vmax.f32 %v829, 0.0
        %v846 = vmax.f32 %v830, 0.0
        %v847 = vpack.c.bf16 %v832, %v831
        %v848 = vpack.c.bf16 %v834, %v833
        %v849 = vpack.c.bf16 %v836, %v835
        %v850 = vpack.c.bf16 %v838, %v837
        %v851 = vpack.c.bf16 %v840, %v839
        %v852 = vpack.c.bf16 %v842, %v841
        %v853 = vpack.c.bf16 %v844, %v843
        %v854 = vpack.c.bf16 %v846, %v845
        %v863 = vunpack.c.l.b16 %v847
        %v864 = vunpack.c.h.b16 %v847
        %v865 = vunpack.c.l.b16 %v848
        %v866 = vunpack.c.h.b16 %v848
        %v867 = vunpack.c.l.b16 %v849
        %v868 = vunpack.c.h.b16 %v849
        %v869 = vunpack.c.l.b16 %v850
        %v870 = vunpack.c.h.b16 %v850
        %v871 = vunpack.c.l.b16 %v851
        %v872 = vunpack.c.h.b16 %v851
        %v873 = vunpack.c.l.b16 %v852
        %v874 = vunpack.c.h.b16 %v852
        %v875 = vunpack.c.l.b16 %v853
        %v876 = vunpack.c.h.b16 %v853
        %v877 = vunpack.c.l.b16 %v854
        %v878 = vunpack.c.h.b16 %v854
        %v879 = vpack.c.b16 %v863, %v863
        %v880 = vpack.c.b16 %v864, %v864
        %v881 = vpack.c.b16 %v865, %v865
        %v882 = vpack.c.b16 %v866, %v866
        %v883 = vpack.c.b16 %v867, %v867
        %v884 = vpack.c.b16 %v868, %v868
        %v885 = vpack.c.b16 %v869, %v869
        %v886 = vpack.c.b16 %v870, %v870
        %v887 = vpack.c.b16 %v871, %v871
        %v888 = vpack.c.b16 %v872, %v872
        %v889 = vpack.c.b16 %v873, %v873
        %v890 = vpack.c.b16 %v874, %v874
        %v891 = vpack.c.b16 %v875, %v875
        %v892 = vpack.c.b16 %v876, %v876
        %v893 = vpack.c.b16 %v877, %v877
        %v894 = vpack.c.b16 %v878, %v878
        %911 = vst [vmem:[%s325] sm:$0xf] %v879
        %912 = vst [vmem:[%s325 + $0x4] sm:$0xf] %v880
        %913 = vst [vmem:[%s325 + $0x8] sm:$0xf] %v881
        %914 = vst [vmem:[%s325 + $0xc] sm:$0xf] %v882
        %915 = vst [vmem:[%s325 + $0x10] sm:$0xf] %v883
        %916 = vst [vmem:[%s325 + $0x14] sm:$0xf] %v884
        %917 = vst [vmem:[%s325 + $0x18] sm:$0xf] %v885
        %918 = vst [vmem:[%s325 + $0x1c] sm:$0xf] %v886
        %919 = vst [vmem:[%s325 + $0x20] sm:$0xf] %v887
        %920 = vst [vmem:[%s325 + $0x24] sm:$0xf] %v888
        %921 = vst [vmem:[%s325 + $0x28] sm:$0xf] %v889
        %922 = vst [vmem:[%s325 + $0x2c] sm:$0xf] %v890
        %923 = vst [vmem:[%s325 + $0x30] sm:$0xf] %v891
        %924 = vst [vmem:[%s325 + $0x34] sm:$0xf] %v892
        %925 = vst [vmem:[%s325 + $0x38] sm:$0xf] %v893
        %926 = vst [vmem:[%s325 + $0x3c] sm:$0xf] %v894
        %s927 = sand.u32 %s185, 1
        %s928 = scalar_lea.sflag [#allocation4], %s927
        %s929 = sand.u32 %s185, 1
        %s930 = smul.addr %s929, 64
        %s931 = scalar_lea.vmem [#allocation8], %s930
        // Predicated region
        $region61: #{tpu_custom_call.1} parent=47 // pred_check
          %p932 = pneg %p195
        $region62: #{tpu_custom_call.1} parent=47 // pred_check_branch
          %934 = sbr.rel (%p932) target = $region64
        $region63: #{tpu_custom_call.1} parent=47 // pred_region
          %s935 = smul.u32 16, %s25
          %s937 = ssub.s32 1024, 1024
          %938 = vsyncadd %s928, %s937
          %s939 = smul.addr %s935, 64
          %s940 = scalar_lea.hbm %s7, %s939
          %s941 = sshll.u32 %s931, 4
          %s942 = int_to_ptr.vmem [resolvable:$true] %s941
          %947 = dma.vmem_to_hbm [thread:$0]  %s942, 1024, %s940, %s928, 64, 64, 4
        $region64: #{tpu_custom_call.1} parent=47 // pred_fallthru
          _
      $region48: #{tpu_custom_call.1} parent=5 // pred_fallthru
        _
      %p948 = scmp.le.s32.totalorder 2, %s20
      // Predicated region
      $region65: #{tpu_custom_call.1} parent=5 // pred_check
        %p949 = pneg %p948
      $region66: #{tpu_custom_call.1} parent=5 // pred_check_branch
        %951 = sbr.rel (%p949) target = $region68
      $region67: #{tpu_custom_call.1} parent=5 // pred_region
        %s952 = ssub.s32 %s20, 2
        // Predicated region
        $region69: #{tpu_custom_call.1} parent=67 // pred_check
          %p953 = pneg %p201
        $region70: #{tpu_custom_call.1} parent=67 // pred_check_branch
          %955 = sbr.rel (%p953) target = $region72
        $region71: #{tpu_custom_call.1} parent=67 // pred_region
          %s956 = sand.u32 %s186, 1
          %s957 = scalar_lea.sflag [#allocation4], %s956
          %s958 = sand.u32 %s186, 1
          %s959 = smul.addr %s958, 64
          %s960 = scalar_lea.vmem [#allocation8], %s959
          %961 = dma.done %s957, 1024
        $region72: #{tpu_custom_call.1} parent=67 // pred_fallthru
          _
      $region68: #{tpu_custom_call.1} parent=5 // pred_fallthru
        _
    $region6: #{tpu_custom_call.1} parent=1 // loop_footer
      %s24 = sadd.s32 1, %s20
    $region7: #{tpu_custom_call.1} parent=1 // loop_footer_branch
      %19 = sbr.rel target = $region3
    $region8: #{tpu_custom_call.1} parent=1 // loop_exit
      _
    %962 = vsyncpa [#allocation3], 1
    %s963 = scalar_lea.sflag [#allocation3], 1
    %964 = vsyncpa %s963, 1
    %965 = vsyncpa [#allocation6], 1
    %966 = vsyncpa [#allocation4], 1
    %s967 = scalar_lea.sflag [#allocation4], 1
    %968 = vsyncpa %s967, 1

</llo_original>
